<compile_context>
chip_gen: v6e
topology: v6e:2x2x1
jax: 0.10.0
libtpu: 0.0.40
codegen_flags: <defaults>
</compile_context>

<pallas_src>
import math

import jax
import jax.numpy as jnp
from jax.experimental import pallas as pl
from jax.experimental.pallas import tpu as pltpu


def _frozen_bn1d_kernel(x_ref, s_ref, b_ref, o_ref):
    # x_ref: (block_n, CW); s_ref / b_ref: (1, CW) VMEM-resident fused params.
    o_ref[...] = (x_ref[...] * s_ref[...] + b_ref[...]).astype(o_ref.dtype)


def _vmem_budget():
    """Generation-aware (target_block_bytes, vmem_limit_bytes)."""
    try:
        cap = int(pltpu.get_tpu_info().vmem_capacity_bytes)
    except Exception:
        cap = 64 * 1024 * 1024  # conservative fallback (v7x-sized)
    if cap >= 100 * 1024 * 1024:          # v5e / v6e: 128 MiB physical VMEM
        return 8 * 1024 * 1024, 64 * 1024 * 1024
    else:                                  # v7x: 64 MiB per TensorCore
        return 6 * 1024 * 1024, 44 * 1024 * 1024


def frozen_batch_norm_1d(x, weight, bias, running_mean, running_var,
                         *, target_block_bytes=None, donate_x=False):
    """x: (N, C); params: (C,). Returns (N, C) with x.dtype."""
    assert x.ndim == 2, "FrozenBatchNorm1d expects (N, C) input"
    n, c = x.shape

    default_block_bytes, vmem_limit_bytes = _vmem_budget()
    if target_block_bytes is None:
        target_block_bytes = default_block_bytes

    # Fused per-channel params: compute in f32 (O(C), outside the kernel),
    # then cast to x.dtype (covers the torch fp16 path, and bf16 too).
    # NOTE: no eps is added to running_var -- this mirrors the module exactly.
    w32 = weight.astype(jnp.float32)
    b32 = bias.astype(jnp.float32)
    m32 = running_mean.astype(jnp.float32)
    v32 = running_var.astype(jnp.float32)
    scale = (w32 * jax.lax.rsqrt(v32)).astype(x.dtype)
    fused_bias = (b32 - m32 * (w32 * jax.lax.rsqrt(v32))).astype(x.dtype)

    dtype_bytes = jnp.dtype(x.dtype).itemsize
    sublane = {4: 8, 2: 16, 1: 32}.get(dtype_bytes, 8)

    # Lane-density: fold rows so the lane width becomes a multiple of 128
    # (unmasked full-lane stores) whenever C is not already a multiple of 128.
    fold = 1
    if c % 128 != 0:
        f = 128 // math.gcd(c, 128)
        # guard: a minimal (sublane, C*f) block must stay comfortably small
        if f > 1 and n % f == 0 and c * f * sublane * dtype_bytes <= 2 * 1024 * 1024:
            fold = f
    cw = c * fold          # lane width presented to the kernel
    nw = n // fold         # rows presented to the kernel

    x_k = x.reshape(nw, cw)
    scale_k = jnp.tile(scale, fold).reshape(1, cw)
    bias_k = jnp.tile(fused_bias, fold).reshape(1, cw)

    # ---- Row-block selection -------------------------------------------------
    row_bytes = cw * dtype_bytes
    total_bytes = nw * row_bytes

    rows_target = max(sublane, target_block_bytes // max(1, row_bytes))
    rows_target = max(sublane, (rows_target // sublane) * sublane)

    # Never degenerate to a single grid step on non-trivial inputs: keep at
    # least 4 row blocks so DMAs pipeline and both v7x cores get work.
    MIN_STEPS = 4
    if total_bytes > (1 << 20) and nw >= MIN_STEPS * sublane:
        cap_rows = ((nw // MIN_STEPS) // sublane) * sublane
        rows_target = max(sublane, min(rows_target, cap_rows))

    if nw <= rows_target:
        block_n = nw                      # tiny input: full extent is legal
    else:
        # Prefer a sublane-aligned divisor of nw (no ragged final block).
        block_n = 0
        d = rows_target
        while d >= sublane:
            if nw % d == 0:
                block_n = d
                break
            d -= sublane
        if block_n == 0:
            block_n = rows_target         # ragged final block (masked), still correct
    grid_n = pl.cdiv(nw, block_n)
    # ---------------------------------------------------------------------------

    x_spec = pl.BlockSpec((block_n, cw), lambda i: (i, 0))
    out_spec = pl.BlockSpec((block_n, cw), lambda i: (i, 0))
    # Constant index_map -> params stay resident in VMEM across the whole grid.
    param_spec = pl.BlockSpec((1, cw), lambda i: (0, 0))

    out = pl.pallas_call(
        _frozen_bn1d_kernel,
        out_shape=jax.ShapeDtypeStruct((nw, cw), x.dtype),
        grid=(grid_n,),
        in_specs=[x_spec, param_spec, param_spec],
        out_specs=out_spec,
        input_output_aliases=({0: 0} if donate_x else {}),
        compiler_params=pltpu.CompilerParams(
            dimension_semantics=("parallel",),
            vmem_limit_bytes=vmem_limit_bytes,
        ),
    )(x_k, scale_k, bias_k)

    return out.reshape(n, c)


if __name__ == "__main__":
    key = jax.random.PRNGKey(0)

    # --- Test 1: the module-sized case (N=16, C=32, f32) ----------------------
    n_batch, n_feat = 16, 32
    k1, k2, k3, k4, k5, k6 = jax.random.split(key, 6)
    weight = jnp.ones((n_feat,), jnp.float32) + 0.1 * jax.random.normal(k1, (n_feat,))
    bias = jnp.zeros((n_feat,), jnp.float32) + 0.1 * jax.random.normal(k2, (n_feat,))
    running_mean = jnp.zeros((n_feat,), jnp.float32) + 0.1 * jax.random.normal(k3, (n_feat,))
    running_var = jnp.ones((n_feat,), jnp.float32) + 0.1 * jnp.abs(jax.random.normal(k4, (n_feat,)))
    x = jax.random.normal(k5, (n_batch, n_feat), jnp.float32)

    out = frozen_batch_norm_1d(x, weight, bias, running_mean, running_var)
    out = jax.block_until_ready(out)

    scale_ref = weight * jax.lax.rsqrt(running_var)
    bias_ref = bias - running_mean * scale_ref
    ref = x * scale_ref.reshape(1, -1) + bias_ref.reshape(1, -1)
    assert out.shape == ref.shape and out.dtype == x.dtype
    assert jnp.allclose(out, ref, atol=1e-5, rtol=1e-5), "mismatch vs reference (test 1)"

    # --- Test 2: non-power-of-128 channel count + multi-step grid (fold path) --
    n2, c2 = 256, 96
    w2 = jnp.ones((c2,), jnp.float32) + 0.05 * jax.random.normal(k6, (c2,))
    b2 = 0.1 * jax.random.normal(k1, (c2,))
    m2 = 0.1 * jax.random.normal(k2, (c2,))
    v2 = jnp.ones((c2,), jnp.float32) + 0.1 * jnp.abs(jax.random.normal(k3, (c2,)))
    x2 = jax.random.normal(k4, (n2, c2), jnp.float32)

    # Small block override to force grid_n > 1 even at this small test size.
    out2 = frozen_batch_norm_1d(x2, w2, b2, m2, v2, target_block_bytes=8192)
    out2 = jax.block_until_ready(out2)

    s2 = w2 * jax.lax.rsqrt(v2)
    ref2 = x2 * s2.reshape(1, -1) + (b2 - m2 * s2).reshape(1, -1)
    assert jnp.allclose(out2, ref2, atol=1e-5, rtol=1e-5), "mismatch vs reference (test 2)"

    print("KERNEL_OK")
</pallas_src>

<mosaic_0001>
module attributes {stable_mosaic.version = 11 : i64} {
  func.func @_frozen_bn1d_kernel(%arg0: i32, %arg1: memref<4x128xf32, #tpu.memory_space<vmem>>, %arg2: memref<1x128xf32, #tpu.memory_space<vmem>>, %arg3: memref<1x128xf32, #tpu.memory_space<vmem>>, %arg4: memref<4x128xf32, #tpu.memory_space<vmem>>) attributes {dimension_semantics = [#tpu.dimension_semantics<parallel>], iteration_bounds = array<i64: 1>, scalar_prefetch = 0 : i64, scratch_operands = 0 : i64, tpu.core_type = #tpu.core_type<tc>, window_params = [{transform_indices = @transform_0, window_bounds = array<i64: 4, 128>}, {pipeline_mode = #tpu.pipeline_mode<synchronous>, transform_indices = @transform_1, window_bounds = array<i64: 1, 128>}, {pipeline_mode = #tpu.pipeline_mode<synchronous>, transform_indices = @transform_2, window_bounds = array<i64: 1, 128>}, {transform_indices = @transform_3, window_bounds = array<i64: 4, 128>}]} {
    %c0 = arith.constant 0 : index
    %c0_0 = arith.constant 0 : index
    %0 = vector.load %arg1[%c0, %c0_0] : memref<4x128xf32, #tpu.memory_space<vmem>>, vector<4x128xf32>
    %c0_1 = arith.constant 0 : index
    %c0_2 = arith.constant 0 : index
    %1 = vector.load %arg2[%c0_1, %c0_2] : memref<1x128xf32, #tpu.memory_space<vmem>>, vector<1x128xf32>
    %2 = vector.broadcast %1 : vector<1x128xf32> to vector<4x128xf32>
    %3 = arith.mulf %0, %2 : vector<4x128xf32>
    %c0_3 = arith.constant 0 : index
    %c0_4 = arith.constant 0 : index
    %4 = vector.load %arg3[%c0_3, %c0_4] : memref<1x128xf32, #tpu.memory_space<vmem>>, vector<1x128xf32>
    %5 = vector.broadcast %4 : vector<1x128xf32> to vector<4x128xf32>
    %6 = arith.addf %3, %5 : vector<4x128xf32>
    %c0_5 = arith.constant 0 : index
    %c0_6 = arith.constant 0 : index
    %7 = vector.load %arg4[%c0_5, %c0_6] : memref<4x128xf32, #tpu.memory_space<vmem>>, vector<4x128xf32>
    tpu.vector_store %arg4[%c0_5, %c0_6], %6 {strides = array<i32>} : memref<4x128xf32, #tpu.memory_space<vmem>>, vector<4x128xf32>,
    return
  }
  func.func @transform_0(%arg0: i32) -> (i32, i32) {
    %c0_i32 = arith.constant 0 : i32
    %c0_i32_0 = arith.constant 0 : i32
    return %arg0, %c0_i32 : i32, i32
  }
  func.func @transform_1(%arg0: i32) -> (i32, i32) {
    %c0_i32 = arith.constant 0 : i32
    %c0_i32_0 = arith.constant 0 : i32
    %c0_i32_1 = arith.constant 0 : i32
    return %c0_i32, %c0_i32_0 : i32, i32
  }
  func.func @transform_2(%arg0: i32) -> (i32, i32) {
    %c0_i32 = arith.constant 0 : i32
    %c0_i32_0 = arith.constant 0 : i32
    %c0_i32_1 = arith.constant 0 : i32
    return %c0_i32, %c0_i32_0 : i32, i32
  }
  func.func @transform_3(%arg0: i32) -> (i32, i32) {
    %c0_i32 = arith.constant 0 : i32
    %c0_i32_0 = arith.constant 0 : i32
    return %arg0, %c0_i32 : i32, i32
  }
}

</mosaic_0001>

<llo_original>
// kernel: tpu_custom_call.1
$region0: #{tpu_custom_call.1}
  #allocation0 [shape = 'u32[]', space=smem, size = 0x4, offset = 0x4, fixed_abs, tag = 'smem constant byte address 0x4 - core index']
  #allocation1 [shape = 'u32[144,128]{1,0:T(1,128)}', space=vmem, size = 0x12000, scoped, tag = 'internal scratch']
  %s0 = inlined_call_operand.hbm [shape: f32[4,128], index: 0, kind: input, shape index: {}]
  %s1 = inlined_call_operand.vmem [shape: f32[1,128], index: 1, kind: input, shape index: {}]
  %s2 = inlined_call_operand.vmem [shape: f32[1,128], index: 2, kind: input, shape index: {}]
  %s3 = inlined_call_operand.hbm [shape: f32[4,128], index: 3, kind: output, shape index: {}]
  %s4 = sld [smem:[#allocation0]]
  $region26: #{tpu_custom_call.1} parent=0
    _
  %s6 = ssub.s32 1, %s4
  %s7 = scalar_select 0, %s6, %s4
  $region1: #{tpu_custom_call.1} parent=0
    #allocation2 [shape = 'u8[2048]{0}', space=vmem, size = 0x800, scoped, tag = 'input window, operand 0, single buffered']
    #allocation3 [shape = 's32[1]{0}', space=sflag, size = 0x4, scoped, tag = 'scoped memory for tpu_custom_call.1']
    #allocation4 [shape = 's32[1]{0}', space=sflag, size = 0x4, scoped, tag = 'scoped memory for tpu_custom_call.1']
    #allocation5 [shape = 'u8[2048]{0}', space=vmem, size = 0x800, scoped, tag = 'output window, operand 0, single buffered']
    %8 = vsyncpa [#allocation3], 0
    %9 = vsyncpa [#allocation4], 0
    // Predicated region
    $region2: #{tpu_custom_call.1} parent=1 // pred_check
      _
    $region3: #{tpu_custom_call.1} parent=1 // pred_check_branch
      %11 = sbr.rel (0) target = $region5
    $region4: #{tpu_custom_call.1} parent=1 // pred_region
      %s13 = ssub.s32 64, 64
      %14 = vsyncadd [#allocation3], %s13
      %s16 = sshll.u32 [#allocation2], 4
      %s17 = int_to_ptr.vmem [resolvable:$true] %s16
      %19 = dma.hbm_to_vmem [thread:$0]  %s0, 64, %s17, [#allocation3]
    $region5: #{tpu_custom_call.1} parent=1 // pred_fallthru
      _
    // Predicated region
    $region6: #{tpu_custom_call.1} parent=1 // pred_check
      _
    $region7: #{tpu_custom_call.1} parent=1 // pred_check_branch
      %21 = sbr.rel (0) target = $region9
    $region8: #{tpu_custom_call.1} parent=1 // pred_region
      _
    $region9: #{tpu_custom_call.1} parent=1 // pred_fallthru
      _
    // Predicated region
    $region10: #{tpu_custom_call.1} parent=1 // pred_check
      _
    $region11: #{tpu_custom_call.1} parent=1 // pred_check_branch
      %23 = sbr.rel (0) target = $region13
    $region12: #{tpu_custom_call.1} parent=1 // pred_region
      _
    $region13: #{tpu_custom_call.1} parent=1 // pred_fallthru
      _
    // Predicated region
    $region14: #{tpu_custom_call.1} parent=1 // pred_check
      _
    $region15: #{tpu_custom_call.1} parent=1 // pred_check_branch
      %25 = sbr.rel (0) target = $region17
    $region16: #{tpu_custom_call.1} parent=1 // pred_region
      %26 = dma.done [#allocation3], 64
    $region17: #{tpu_custom_call.1} parent=1 // pred_fallthru
      _
    %v27 = vld [vmem:[#allocation2] sm:$0xf]
    %v28 = vld [vmem:[%s1] sm:$0x1]
    %v30 = vlaneseq
    %v31 = vshrl.u32 %v30, 7
    %v32 = vsub.s32 0, %v31
    %v33 = vrot.slane %v28, %v32
    %v35 = vmul.f32 %v27, %v33
    %v36 = vld [vmem:[%s2] sm:$0x1]
    %v38 = vlaneseq
    %v39 = vshrl.u32 %v38, 7
    %v40 = vsub.s32 0, %v39
    %v41 = vrot.slane %v36, %v40
    %v43 = vadd.f32 %v35, %v41
    %44 = vst [vmem:[#allocation5] sm:$0xf] %v43
    // Predicated region
    $region18: #{tpu_custom_call.1} parent=1 // pred_check
      _
    $region19: #{tpu_custom_call.1} parent=1 // pred_check_branch
      %46 = sbr.rel (0) target = $region21
    $region20: #{tpu_custom_call.1} parent=1 // pred_region
      %s48 = ssub.s32 64, 64
      %49 = vsyncadd [#allocation4], %s48
      %s51 = sshll.u32 [#allocation5], 4
      %s52 = int_to_ptr.vmem [resolvable:$true] %s51
      %54 = dma.vmem_to_hbm [thread:$0]  %s52, 64, %s3, [#allocation4]
    $region21: #{tpu_custom_call.1} parent=1 // pred_fallthru
      _
    // Predicated region
    $region22: #{tpu_custom_call.1} parent=1 // pred_check
      _
    $region23: #{tpu_custom_call.1} parent=1 // pred_check_branch
      %56 = sbr.rel (0) target = $region25
    $region24: #{tpu_custom_call.1} parent=1 // pred_region
      %57 = dma.done [#allocation4], 64
    $region25: #{tpu_custom_call.1} parent=1 // pred_fallthru
      _
    %58 = vsyncpa [#allocation3], 1
    %59 = vsyncpa [#allocation4], 1

</llo_original>
